<compile_context>
chip_gen: v6e
topology: v6e:2x2x1
jax: 0.10.0
libtpu: 0.0.40
codegen_flags: <defaults>
</compile_context>

<pallas_src>
import functools

import jax
import jax.numpy as jnp
from jax.experimental import pallas as pl
from jax.experimental.pallas import tpu as pltpu


LN_EPS = 0.1          # nn.LayerNorm(hidden_dim, eps=0.1)
NORM_EPS_SQ = 1e-24   # F.normalize eps=1e-12, applied to the squared norm
LANE = 128
SUBLANE = 8


def _round_up(n, m):
    return ((n + m - 1) // m) * m


def _swish(v):
    return v * jax.nn.sigmoid(v)


def _layernorm(v, g, b, n_real, eps=LN_EPS):
    """LayerNorm over the last axis of a zero-padded (.., H_pad) tensor.

    One-pass variance (two XLU reductions total instead of the naive three)
    and rsqrt (EUP slot) instead of sqrt + divide (VPU).  Sums are divided by
    the *real* feature count so padded lanes do not bias the statistics; g/b
    are zero on padded lanes so the output stays zero there.
    """
    inv_n = 1.0 / float(n_real)
    s = jnp.sum(v, axis=-1, keepdims=True)
    s2 = jnp.sum(v * v, axis=-1, keepdims=True)
    mean = s * inv_n
    var = s2 * inv_n - mean * mean
    inv = jax.lax.rsqrt(var + eps)
    return (v - mean) * inv * g + b


def encoder_kernel(
    x_ref,                      # (TILE_B, TILE_K)  current batch/K tile of x
    emb_ref,                    # (TILE_K, H_pad)   current K tile of embedding
    ebias_ref,
    ln1g_ref, ln1b_ref,
    fc2w_ref, fc2b_ref,
    ln2g_ref, ln2b_ref,
    fc3w_ref, fc3b_ref,
    ln3g_ref, ln3b_ref,
    headw_ref, headb_ref,       # fused [mu | logvar] head, lane-dense
    out_ref,                    # (TILE_B, HEAD_pad) fused [mu | logvar] output
    h_acc, sq_acc,              # VMEM scratch accumulators
    *, hidden_dim, matmul_dtype,
):
    k = pl.program_id(1)

    @pl.when(k == 0)
    def _():
        h_acc[...] = jnp.zeros_like(h_acc)
        sq_acc[...] = jnp.zeros_like(sq_acc)

    # Partial embedding matmul over this K tile + partial sum-of-squares for
    # the (deferred) per-row L2 normalization.
    x = x_ref[...].astype(jnp.float32)
    sq_acc[...] += jnp.sum(x * x, axis=-1, keepdims=True)
    h_acc[...] += jnp.dot(
        x.astype(matmul_dtype), emb_ref[...],
        preferred_element_type=jnp.float32)

    @pl.when(k == pl.num_programs(1) - 1)
    def _():
        # F.normalize(x, p=2, dim=1) applied after the matmul:
        #   (x / max(||x||, 1e-12)) @ E == (x @ E) * rsqrt(max(||x||^2, 1e-24))
        inv_norm = jax.lax.rsqrt(jnp.maximum(sq_acc[...], NORM_EPS_SQ))
        # TODO(synk): F.dropout is identity in eval mode; training-mode dropout
        # (pltpu.prng_random_bits-based masking) is not implemented here.
        h = h_acc[...] * inv_norm + ebias_ref[...]

        h1 = _layernorm(_swish(h), ln1g_ref[...], ln1b_ref[...], hidden_dim)

        fc2 = jnp.dot(h1.astype(matmul_dtype), fc2w_ref[...],
                      preferred_element_type=jnp.float32) + fc2b_ref[...]
        h2 = _layernorm(_swish(fc2 + h1), ln2g_ref[...], ln2b_ref[...],
                        hidden_dim)

        fc3 = jnp.dot(h2.astype(matmul_dtype), fc3w_ref[...],
                      preferred_element_type=jnp.float32) + fc3b_ref[...]
        h3 = _layernorm(_swish(fc3 + h1 + h2), ln3g_ref[...], ln3b_ref[...],
                        hidden_dim)

        # Fused mu/logvar head: one MXU push, lane-dense store.
        head = jnp.dot(h3.astype(matmul_dtype), headw_ref[...],
                       preferred_element_type=jnp.float32) + headb_ref[...]
        out_ref[...] = head.astype(out_ref.dtype)


def encoder_forward(x, params, *, tile_b=None, tile_k=512, use_bf16=False):
    """Encoder forward in one pallas_call.

    x: (B, input_dim) float32.  params: dict of unpadded weights (init_params).
    Returns (mu, logvar), each (B, latent_dim) float32.
    """
    B, input_dim = x.shape
    hidden_dim = params["fc2_w"].shape[0]
    latent_dim = params["fc_mu_w"].shape[1]
    head_dim = 2 * latent_dim

    # ---- lane-/sublane-aligned padded shapes & tile sizes -------------------
    h_p = _round_up(hidden_dim, LANE)
    head_p = _round_up(head_dim, LANE)
    tk = _round_up(min(tile_k, _round_up(input_dim, LANE)), LANE)
    d_p = _round_up(input_dim, tk)
    if tile_b is None:
        tile_b = min(LANE, _round_up(B, SUBLANE))
    tile_b = _round_up(tile_b, SUBLANE)
    b_p = _round_up(B, tile_b)

    mm_dtype = jnp.bfloat16 if use_bf16 else jnp.float32

    def pad2(a, rows, cols):
        a = jnp.asarray(a, jnp.float32)
        return jnp.pad(a, ((0, rows - a.shape[0]), (0, cols - a.shape[1])))

    def as_mm(a):
        return a.astype(mm_dtype)   # bf16 weights halve HBM traffic on v6e/v7x

    # ---- pad / fuse parameters once, outside the kernel ---------------------
    x_p = pad2(x, b_p, d_p)
    emb_w = as_mm(pad2(params["emb_w"], d_p, h_p))
    fc2_w = as_mm(pad2(params["fc2_w"], h_p, h_p))
    fc3_w = as_mm(pad2(params["fc3_w"], h_p, h_p))
    head_w = as_mm(pad2(
        jnp.concatenate([params["fc_mu_w"], params["fc_logvar_w"]], axis=1),
        h_p, head_p))
    ebias = pad2(params["enc_bias"], 1, h_p)
    fc2_b = pad2(params["fc2_b"], 1, h_p)
    fc3_b = pad2(params["fc3_b"], 1, h_p)
    head_b = pad2(
        jnp.concatenate([params["fc_mu_b"], params["fc_logvar_b"]], axis=1),
        1, head_p)
    # LN gamma/beta padded with ZEROS so padded lanes stay exactly zero.
    ln1_g = pad2(params["ln1_g"], 1, h_p)
    ln1_b = pad2(params["ln1_b"], 1, h_p)
    ln2_g = pad2(params["ln2_g"], 1, h_p)
    ln2_b = pad2(params["ln2_b"], 1, h_p)
    ln3_g = pad2(params["ln3_g"], 1, h_p)
    ln3_b = pad2(params["ln3_b"], 1, h_p)

    inputs = (x_p, emb_w, ebias,
              ln1_g, ln1_b, fc2_w, fc2_b, ln2_g, ln2_b,
              fc3_w, fc3_b, ln3_g, ln3_b, head_w, head_b)

    nb = b_p // tile_b
    nk = d_p // tk

    def resident(a):
        # Full-array block kept resident in VMEM for the whole grid.
        return pl.BlockSpec(a.shape, lambda i, k, _nd=a.ndim: (0,) * _nd)

    in_specs = [
        pl.BlockSpec((tile_b, tk), lambda i, k: (i, k)),   # x: batch & K tiled
        pl.BlockSpec((tk, h_p), lambda i, k: (k, 0)),      # emb_w: K tiled
    ] + [resident(a) for a in inputs[2:]]

    out_specs = pl.BlockSpec((tile_b, head_p), lambda i, k: (i, 0))
    out_shape = jax.ShapeDtypeStruct((b_p, head_p), jnp.float32)

    kernel = functools.partial(
        encoder_kernel, hidden_dim=hidden_dim, matmul_dtype=mm_dtype)

    flops = 2 * b_p * (d_p * h_p + 2 * h_p * h_p + h_p * head_p) \
        + 20 * b_p * h_p
    transcendentals = 3 * b_p * h_p + 4 * b_p
    bytes_accessed = sum(int(a.size) * a.dtype.itemsize for a in inputs) \
        + b_p * head_p * 4

    out = pl.pallas_call(
        kernel,
        grid_spec=pltpu.PrefetchScalarGridSpec(
            num_scalar_prefetch=0,
            grid=(nb, nk),
            in_specs=in_specs,
            out_specs=out_specs,
            scratch_shapes=[
                pltpu.VMEM((tile_b, h_p), jnp.float32),   # embedding-matmul acc
                pltpu.VMEM((tile_b, 1), jnp.float32),     # sum-of-squares acc
            ]),
        out_shape=out_shape,
        compiler_params=pltpu.CompilerParams(
            dimension_semantics=("parallel", "arbitrary"),
            vmem_limit_bytes=48 * 1024 * 1024),
        cost_estimate=pl.CostEstimate(
            flops=int(flops),
            transcendentals=int(transcendentals),
            bytes_accessed=int(bytes_accessed)),
    )(*inputs)

    mu = out[:B, :latent_dim]
    logvar = out[:B, latent_dim:head_dim]
    return mu, logvar


def init_params(key, input_dim, hidden_dim, latent_dim):
    """Deterministic synthetic parameter init (shapes match the torch module)."""
    ks = jax.random.split(key, 8)

    def xavier(k, fan_in, fan_out):
        std = (2.0 / (fan_in + fan_out)) ** 0.5
        return std * jax.random.normal(k, (fan_in, fan_out), dtype=jnp.float32)

    return {
        "emb_w": xavier(ks[0], input_dim, hidden_dim),
        "enc_bias": 0.001 * jax.random.normal(ks[1], (1, hidden_dim), jnp.float32),
        "ln1_g": jnp.ones((1, hidden_dim), jnp.float32),
        "ln1_b": jnp.zeros((1, hidden_dim), jnp.float32),
        "fc2_w": xavier(ks[2], hidden_dim, hidden_dim),
        "fc2_b": 0.001 * jax.random.normal(ks[3], (1, hidden_dim), jnp.float32),
        "ln2_g": jnp.ones((1, hidden_dim), jnp.float32),
        "ln2_b": jnp.zeros((1, hidden_dim), jnp.float32),
        "fc3_w": xavier(ks[4], hidden_dim, hidden_dim),
        "fc3_b": 0.001 * jax.random.normal(ks[5], (1, hidden_dim), jnp.float32),
        "ln3_g": jnp.ones((1, hidden_dim), jnp.float32),
        "ln3_b": jnp.zeros((1, hidden_dim), jnp.float32),
        "fc_mu_w": xavier(ks[6], hidden_dim, latent_dim),
        "fc_mu_b": jnp.zeros((1, latent_dim), jnp.float32),
        "fc_logvar_w": xavier(ks[7], hidden_dim, latent_dim),
        "fc_logvar_b": jnp.zeros((1, latent_dim), jnp.float32),
    }


def reference_forward(x, p, eps=LN_EPS):
    """Pure-JAX reference mirroring the torch forward in eval mode."""
    def ln(v, g, b):
        m = jnp.mean(v, axis=-1, keepdims=True)
        var = jnp.mean((v - m) ** 2, axis=-1, keepdims=True)
        return (v - m) / jnp.sqrt(var + eps) * g + b

    xn = x / jnp.maximum(jnp.linalg.norm(x, axis=1, keepdims=True), 1e-12)
    h = xn @ p["emb_w"] + p["enc_bias"]
    h1 = ln(_swish(h), p["ln1_g"], p["ln1_b"])
    h2 = ln(_swish(h1 @ p["fc2_w"] + p["fc2_b"] + h1), p["ln2_g"], p["ln2_b"])
    h3 = ln(_swish(h2 @ p["fc3_w"] + p["fc3_b"] + h1 + h2),
            p["ln3_g"], p["ln3_b"])
    return (h3 @ p["fc_mu_w"] + p["fc_mu_b"],
            h3 @ p["fc_logvar_w"] + p["fc_logvar_b"])


if __name__ == "__main__":
    B, INPUT_DIM, HIDDEN_DIM, LATENT_DIM = 8, 64, 32, 16

    key = jax.random.PRNGKey(0)
    kx, kp = jax.random.split(key)
    x = jax.random.uniform(kx, (B, INPUT_DIM), dtype=jnp.float32)
    params = init_params(kp, INPUT_DIM, HIDDEN_DIM, LATENT_DIM)

    # f32 MXU path — exact (within fp rounding) against the reference.
    mu, logvar = encoder_forward(x, params)
    jax.block_until_ready((mu, logvar))
    mu_ref, logvar_ref = reference_forward(x, params)
    assert mu.shape == (B, LATENT_DIM) and logvar.shape == (B, LATENT_DIM)
    assert jnp.allclose(mu, mu_ref, atol=1e-3, rtol=1e-3), "mu mismatch"
    assert jnp.allclose(logvar, logvar_ref, atol=1e-3, rtol=1e-3), "logvar mismatch"

    # bf16 MXU-operand path (v6e/v7x perf mode): check it compiles, runs and
    # stays finite (lower precision, so no tight tolerance here).
    mu_bf, logvar_bf = encoder_forward(x, params, use_bf16=True)
    jax.block_until_ready((mu_bf, logvar_bf))
    assert bool(jnp.all(jnp.isfinite(mu_bf)) & jnp.all(jnp.isfinite(logvar_bf)))

    print("KERNEL_OK")
</pallas_src>

<mosaic_0001>
module attributes {stable_mosaic.version = 11 : i64} {
  func.func @encoder_kernel(%arg0: i32, %arg1: i32, %arg2: memref<8x128xf32, #tpu.memory_space<vmem>>, %arg3: memref<128x128xf32, #tpu.memory_space<vmem>>, %arg4: memref<1x128xf32, #tpu.memory_space<vmem>>, %arg5: memref<1x128xf32, #tpu.memory_space<vmem>>, %arg6: memref<1x128xf32, #tpu.memory_space<vmem>>, %arg7: memref<128x128xf32, #tpu.memory_space<vmem>>, %arg8: memref<1x128xf32, #tpu.memory_space<vmem>>, %arg9: memref<1x128xf32, #tpu.memory_space<vmem>>, %arg10: memref<1x128xf32, #tpu.memory_space<vmem>>, %arg11: memref<128x128xf32, #tpu.memory_space<vmem>>, %arg12: memref<1x128xf32, #tpu.memory_space<vmem>>, %arg13: memref<1x128xf32, #tpu.memory_space<vmem>>, %arg14: memref<1x128xf32, #tpu.memory_space<vmem>>, %arg15: memref<128x128xf32, #tpu.memory_space<vmem>>, %arg16: memref<1x128xf32, #tpu.memory_space<vmem>>, %arg17: memref<8x128xf32, #tpu.memory_space<vmem>>, %arg18: memref<8x128xf32, #tpu.memory_space<vmem>>, %arg19: memref<8x1xf32, #tpu.memory_space<vmem>>) attributes {dimension_semantics = [#tpu.dimension_semantics<parallel>, #tpu.dimension_semantics<arbitrary>], iteration_bounds = array<i64: 1, 1>, scalar_prefetch = 0 : i64, scratch_operands = 2 : i64, tpu.core_type = #tpu.core_type<tc>, window_params = [{transform_indices = @transform_0, window_bounds = array<i64: 8, 128>}, {transform_indices = @transform_1, window_bounds = array<i64: 128, 128>}, {pipeline_mode = #tpu.pipeline_mode<synchronous>, transform_indices = @transform_2, window_bounds = array<i64: 1, 128>}, {pipeline_mode = #tpu.pipeline_mode<synchronous>, transform_indices = @transform_3, window_bounds = array<i64: 1, 128>}, {pipeline_mode = #tpu.pipeline_mode<synchronous>, transform_indices = @transform_4, window_bounds = array<i64: 1, 128>}, {pipeline_mode = #tpu.pipeline_mode<synchronous>, transform_indices = @transform_5, window_bounds = array<i64: 128, 128>}, {pipeline_mode = #tpu.pipeline_mode<synchronous>, transform_indices = @transform_6, window_bounds = array<i64: 1, 128>}, {pipeline_mode = #tpu.pipeline_mode<synchronous>, transform_indices = @transform_7, window_bounds = array<i64: 1, 128>}, {pipeline_mode = #tpu.pipeline_mode<synchronous>, transform_indices = @transform_8, window_bounds = array<i64: 1, 128>}, {pipeline_mode = #tpu.pipeline_mode<synchronous>, transform_indices = @transform_9, window_bounds = array<i64: 128, 128>}, {pipeline_mode = #tpu.pipeline_mode<synchronous>, transform_indices = @transform_10, window_bounds = array<i64: 1, 128>}, {pipeline_mode = #tpu.pipeline_mode<synchronous>, transform_indices = @transform_11, window_bounds = array<i64: 1, 128>}, {pipeline_mode = #tpu.pipeline_mode<synchronous>, transform_indices = @transform_12, window_bounds = array<i64: 1, 128>}, {pipeline_mode = #tpu.pipeline_mode<synchronous>, transform_indices = @transform_13, window_bounds = array<i64: 128, 128>}, {pipeline_mode = #tpu.pipeline_mode<synchronous>, transform_indices = @transform_14, window_bounds = array<i64: 1, 128>}, {transform_indices = @transform_15, window_bounds = array<i64: 8, 128>}]} {
    %c0_i32 = arith.constant 0 : i32
    %0 = arith.cmpi eq, %arg1, %c0_i32 : i32
    %1 = arith.extui %0 : i1 to i32
    %c0_i32_0 = arith.constant 0 : i32
    %2 = arith.cmpi ne, %1, %c0_i32_0 : i32
    scf.if %2 {
      %cst_15 = arith.constant 0.000000e+00 : f32
      %18 = vector.broadcast %cst_15 : f32 to vector<8x128xf32>
      %c0_16 = arith.constant 0 : index
      %c0_17 = arith.constant 0 : index
      %19 = vector.load %arg18[%c0_16, %c0_17] : memref<8x128xf32, #tpu.memory_space<vmem>>, vector<8x128xf32>
      tpu.vector_store %arg18[%c0_16, %c0_17], %18 {strides = array<i32>} : memref<8x128xf32, #tpu.memory_space<vmem>>, vector<8x128xf32>,
      %cst_18 = arith.constant 0.000000e+00 : f32
      %20 = vector.broadcast %cst_18 : f32 to vector<8x1xf32>
      %c0_19 = arith.constant 0 : index
      %c0_20 = arith.constant 0 : index
      %21 = vector.load %arg19[%c0_19, %c0_20] : memref<8x1xf32, #tpu.memory_space<vmem>>, vector<8x1xf32>
      tpu.vector_store %arg19[%c0_19, %c0_20], %20 {strides = array<i32>} : memref<8x1xf32, #tpu.memory_space<vmem>>, vector<8x1xf32>,
    } else {
    }
    %c0 = arith.constant 0 : index
    %c0_1 = arith.constant 0 : index
    %3 = vector.load %arg2[%c0, %c0_1] : memref<8x128xf32, #tpu.memory_space<vmem>>, vector<8x128xf32>
    %c0_2 = arith.constant 0 : index
    %c0_3 = arith.constant 0 : index
    %4 = vector.load %arg19[%c0_2, %c0_3] : memref<8x1xf32, #tpu.memory_space<vmem>>, vector<8x1xf32>
    %5 = arith.mulf %3, %3 : vector<8x128xf32>
    %cst = arith.constant dense<0.000000e+00> : vector<8xf32>
    %6 = vector.multi_reduction <add>, %5, %cst [1] : vector<8x128xf32> to vector<8xf32>
    %7 = vector.shape_cast %6 : vector<8xf32> to vector<8x1xf32>
    %8 = arith.addf %4, %7 : vector<8x1xf32>
    %c0_4 = arith.constant 0 : index
    %c0_5 = arith.constant 0 : index
    %9 = vector.load %arg19[%c0_4, %c0_5] : memref<8x1xf32, #tpu.memory_space<vmem>>, vector<8x1xf32>
    tpu.vector_store %arg19[%c0_4, %c0_5], %8 {strides = array<i32>} : memref<8x1xf32, #tpu.memory_space<vmem>>, vector<8x1xf32>,
    %c0_6 = arith.constant 0 : index
    %c0_7 = arith.constant 0 : index
    %10 = vector.load %arg18[%c0_6, %c0_7] : memref<8x128xf32, #tpu.memory_space<vmem>>, vector<8x128xf32>
    %c0_8 = arith.constant 0 : index
    %c0_9 = arith.constant 0 : index
    %11 = vector.load %arg3[%c0_8, %c0_9] : memref<128x128xf32, #tpu.memory_space<vmem>>, vector<128x128xf32>
    %cst_10 = arith.constant dense<0.000000e+00> : vector<8x128xf32>
    %12 = tpu.matmul %3, %11, %cst_10 {dimension_numbers = #tpu.dot_dimension_numbers<[1], [0], [0], [1], [0, 0, 1, 1], [], []>} : vector<8x128xf32>, vector<128x128xf32>, vector<8x128xf32> -> vector<8x128xf32>
    %13 = arith.addf %10, %12 : vector<8x128xf32>
    %c0_11 = arith.constant 0 : index
    %c0_12 = arith.constant 0 : index
    %14 = vector.load %arg18[%c0_11, %c0_12] : memref<8x128xf32, #tpu.memory_space<vmem>>, vector<8x128xf32>
    tpu.vector_store %arg18[%c0_11, %c0_12], %13 {strides = array<i32>} : memref<8x128xf32, #tpu.memory_space<vmem>>, vector<8x128xf32>,
    %c0_i32_13 = arith.constant 0 : i32
    %15 = arith.cmpi eq, %arg1, %c0_i32_13 : i32
    %16 = arith.extui %15 : i1 to i32
    %c0_i32_14 = arith.constant 0 : i32
    %17 = arith.cmpi ne, %16, %c0_i32_14 : i32
    scf.if %17 {
      %c0_15 = arith.constant 0 : index
      %c0_16 = arith.constant 0 : index
      %18 = vector.load %arg19[%c0_15, %c0_16] : memref<8x1xf32, #tpu.memory_space<vmem>>, vector<8x1xf32>
      %cst_17 = arith.constant 1.000000e-24 : f32
      %19 = vector.broadcast %cst_17 : f32 to vector<8x1xf32>
      %20 = arith.maximumf %18, %19 : vector<8x1xf32>
      %21 = math.rsqrt %20 : vector<8x1xf32>
      %c0_18 = arith.constant 0 : index
      %c0_19 = arith.constant 0 : index
      %22 = vector.load %arg18[%c0_18, %c0_19] : memref<8x128xf32, #tpu.memory_space<vmem>>, vector<8x128xf32>
      %23 = vector.broadcast %21 : vector<8x1xf32> to vector<8x128xf32>
      %24 = arith.mulf %22, %23 : vector<8x128xf32>
      %c0_20 = arith.constant 0 : index
      %c0_21 = arith.constant 0 : index
      %25 = vector.load %arg4[%c0_20, %c0_21] : memref<1x128xf32, #tpu.memory_space<vmem>>, vector<1x128xf32>
      %26 = vector.broadcast %25 : vector<1x128xf32> to vector<8x128xf32>
      %27 = arith.addf %24, %26 : vector<8x128xf32>
      %28 = arith.negf %27 : vector<8x128xf32>
      %29 = math.exp %28 : vector<8x128xf32>
      %cst_22 = arith.constant 1.000000e+00 : f32
      %30 = vector.broadcast %cst_22 : f32 to vector<8x128xf32>
      %31 = arith.addf %30, %29 : vector<8x128xf32>
      %32 = arith.divf %30, %31 : vector<8x128xf32>
      %33 = arith.mulf %27, %32 : vector<8x128xf32>
      %c0_23 = arith.constant 0 : index
      %c0_24 = arith.constant 0 : index
      %34 = vector.load %arg5[%c0_23, %c0_24] : memref<1x128xf32, #tpu.memory_space<vmem>>, vector<1x128xf32>
      %c0_25 = arith.constant 0 : index
      %c0_26 = arith.constant 0 : index
      %35 = vector.load %arg6[%c0_25, %c0_26] : memref<1x128xf32, #tpu.memory_space<vmem>>, vector<1x128xf32>
      %cst_27 = arith.constant dense<0.000000e+00> : vector<8xf32>
      %36 = vector.multi_reduction <add>, %33, %cst_27 [1] : vector<8x128xf32> to vector<8xf32>
      %37 = vector.shape_cast %36 : vector<8xf32> to vector<8x1xf32>
      %38 = arith.mulf %33, %33 : vector<8x128xf32>
      %cst_28 = arith.constant dense<0.000000e+00> : vector<8xf32>
      %39 = vector.multi_reduction <add>, %38, %cst_28 [1] : vector<8x128xf32> to vector<8xf32>
      %40 = vector.shape_cast %39 : vector<8xf32> to vector<8x1xf32>
      %cst_29 = arith.constant 3.125000e-02 : f32
      %41 = vector.broadcast %cst_29 : f32 to vector<8x1xf32>
      %42 = arith.mulf %37, %41 : vector<8x1xf32>
      %cst_30 = arith.constant 3.125000e-02 : f32
      %43 = vector.broadcast %cst_30 : f32 to vector<8x1xf32>
      %44 = arith.mulf %40, %43 : vector<8x1xf32>
      %45 = arith.mulf %42, %42 : vector<8x1xf32>
      %46 = arith.subf %44, %45 : vector<8x1xf32>
      %cst_31 = arith.constant 1.000000e-01 : f32
      %47 = vector.broadcast %cst_31 : f32 to vector<8x1xf32>
      %48 = arith.addf %46, %47 : vector<8x1xf32>
      %49 = math.rsqrt %48 : vector<8x1xf32>
      %50 = vector.broadcast %42 : vector<8x1xf32> to vector<8x128xf32>
      %51 = arith.subf %33, %50 : vector<8x128xf32>
      %52 = vector.broadcast %49 : vector<8x1xf32> to vector<8x128xf32>
      %53 = arith.mulf %51, %52 : vector<8x128xf32>
      %54 = vector.broadcast %34 : vector<1x128xf32> to vector<8x128xf32>
      %55 = arith.mulf %53, %54 : vector<8x128xf32>
      %56 = vector.broadcast %35 : vector<1x128xf32> to vector<8x128xf32>
      %57 = arith.addf %55, %56 : vector<8x128xf32>
      %c0_32 = arith.constant 0 : index
      %c0_33 = arith.constant 0 : index
      %58 = vector.load %arg7[%c0_32, %c0_33] : memref<128x128xf32, #tpu.memory_space<vmem>>, vector<128x128xf32>
      %cst_34 = arith.constant dense<0.000000e+00> : vector<8x128xf32>
      %59 = tpu.matmul %57, %58, %cst_34 {dimension_numbers = #tpu.dot_dimension_numbers<[1], [0], [0], [1], [0, 0, 1, 1], [], []>} : vector<8x128xf32>, vector<128x128xf32>, vector<8x128xf32> -> vector<8x128xf32>
      %c0_35 = arith.constant 0 : index
      %c0_36 = arith.constant 0 : index
      %60 = vector.load %arg8[%c0_35, %c0_36] : memref<1x128xf32, #tpu.memory_space<vmem>>, vector<1x128xf32>
      %61 = vector.broadcast %60 : vector<1x128xf32> to vector<8x128xf32>
      %62 = arith.addf %59, %61 : vector<8x128xf32>
      %63 = arith.addf %62, %57 : vector<8x128xf32>
      %64 = arith.negf %63 : vector<8x128xf32>
      %65 = math.exp %64 : vector<8x128xf32>
      %cst_37 = arith.constant 1.000000e+00 : f32
      %66 = vector.broadcast %cst_37 : f32 to vector<8x128xf32>
      %67 = arith.addf %66, %65 : vector<8x128xf32>
      %68 = arith.divf %66, %67 : vector<8x128xf32>
      %69 = arith.mulf %63, %68 : vector<8x128xf32>
      %c0_38 = arith.constant 0 : index
      %c0_39 = arith.constant 0 : index
      %70 = vector.load %arg9[%c0_38, %c0_39] : memref<1x128xf32, #tpu.memory_space<vmem>>, vector<1x128xf32>
      %c0_40 = arith.constant 0 : index
      %c0_41 = arith.constant 0 : index
      %71 = vector.load %arg10[%c0_40, %c0_41] : memref<1x128xf32, #tpu.memory_space<vmem>>, vector<1x128xf32>
      %cst_42 = arith.constant dense<0.000000e+00> : vector<8xf32>
      %72 = vector.multi_reduction <add>, %69, %cst_42 [1] : vector<8x128xf32> to vector<8xf32>
      %73 = vector.shape_cast %72 : vector<8xf32> to vector<8x1xf32>
      %74 = arith.mulf %69, %69 : vector<8x128xf32>
      %cst_43 = arith.constant dense<0.000000e+00> : vector<8xf32>
      %75 = vector.multi_reduction <add>, %74, %cst_43 [1] : vector<8x128xf32> to vector<8xf32>
      %76 = vector.shape_cast %75 : vector<8xf32> to vector<8x1xf32>
      %cst_44 = arith.constant 3.125000e-02 : f32
      %77 = vector.broadcast %cst_44 : f32 to vector<8x1xf32>
      %78 = arith.mulf %73, %77 : vector<8x1xf32>
      %cst_45 = arith.constant 3.125000e-02 : f32
      %79 = vector.broadcast %cst_45 : f32 to vector<8x1xf32>
      %80 = arith.mulf %76, %79 : vector<8x1xf32>
      %81 = arith.mulf %78, %78 : vector<8x1xf32>
      %82 = arith.subf %80, %81 : vector<8x1xf32>
      %cst_46 = arith.constant 1.000000e-01 : f32
      %83 = vector.broadcast %cst_46 : f32 to vector<8x1xf32>
      %84 = arith.addf %82, %83 : vector<8x1xf32>
      %85 = math.rsqrt %84 : vector<8x1xf32>
      %86 = vector.broadcast %78 : vector<8x1xf32> to vector<8x128xf32>
      %87 = arith.subf %69, %86 : vector<8x128xf32>
      %88 = vector.broadcast %85 : vector<8x1xf32> to vector<8x128xf32>
      %89 = arith.mulf %87, %88 : vector<8x128xf32>
      %90 = vector.broadcast %70 : vector<1x128xf32> to vector<8x128xf32>
      %91 = arith.mulf %89, %90 : vector<8x128xf32>
      %92 = vector.broadcast %71 : vector<1x128xf32> to vector<8x128xf32>
      %93 = arith.addf %91, %92 : vector<8x128xf32>
      %c0_47 = arith.constant 0 : index
      %c0_48 = arith.constant 0 : index
      %94 = vector.load %arg11[%c0_47, %c0_48] : memref<128x128xf32, #tpu.memory_space<vmem>>, vector<128x128xf32>
      %cst_49 = arith.constant dense<0.000000e+00> : vector<8x128xf32>
      %95 = tpu.matmul %93, %94, %cst_49 {dimension_numbers = #tpu.dot_dimension_numbers<[1], [0], [0], [1], [0, 0, 1, 1], [], []>} : vector<8x128xf32>, vector<128x128xf32>, vector<8x128xf32> -> vector<8x128xf32>
      %c0_50 = arith.constant 0 : index
      %c0_51 = arith.constant 0 : index
      %96 = vector.load %arg12[%c0_50, %c0_51] : memref<1x128xf32, #tpu.memory_space<vmem>>, vector<1x128xf32>
      %97 = vector.broadcast %96 : vector<1x128xf32> to vector<8x128xf32>
      %98 = arith.addf %95, %97 : vector<8x128xf32>
      %99 = arith.addf %98, %57 : vector<8x128xf32>
      %100 = arith.addf %99, %93 : vector<8x128xf32>
      %101 = arith.negf %100 : vector<8x128xf32>
      %102 = math.exp %101 : vector<8x128xf32>
      %cst_52 = arith.constant 1.000000e+00 : f32
      %103 = vector.broadcast %cst_52 : f32 to vector<8x128xf32>
      %104 = arith.addf %103, %102 : vector<8x128xf32>
      %105 = arith.divf %103, %104 : vector<8x128xf32>
      %106 = arith.mulf %100, %105 : vector<8x128xf32>
      %c0_53 = arith.constant 0 : index
      %c0_54 = arith.constant 0 : index
      %107 = vector.load %arg13[%c0_53, %c0_54] : memref<1x128xf32, #tpu.memory_space<vmem>>, vector<1x128xf32>
      %c0_55 = arith.constant 0 : index
      %c0_56 = arith.constant 0 : index
      %108 = vector.load %arg14[%c0_55, %c0_56] : memref<1x128xf32, #tpu.memory_space<vmem>>, vector<1x128xf32>
      %cst_57 = arith.constant dense<0.000000e+00> : vector<8xf32>
      %109 = vector.multi_reduction <add>, %106, %cst_57 [1] : vector<8x128xf32> to vector<8xf32>
      %110 = vector.shape_cast %109 : vector<8xf32> to vector<8x1xf32>
      %111 = arith.mulf %106, %106 : vector<8x128xf32>
      %cst_58 = arith.constant dense<0.000000e+00> : vector<8xf32>
      %112 = vector.multi_reduction <add>, %111, %cst_58 [1] : vector<8x128xf32> to vector<8xf32>
      %113 = vector.shape_cast %112 : vector<8xf32> to vector<8x1xf32>
      %cst_59 = arith.constant 3.125000e-02 : f32
      %114 = vector.broadcast %cst_59 : f32 to vector<8x1xf32>
      %115 = arith.mulf %110, %114 : vector<8x1xf32>
      %cst_60 = arith.constant 3.125000e-02 : f32
      %116 = vector.broadcast %cst_60 : f32 to vector<8x1xf32>
      %117 = arith.mulf %113, %116 : vector<8x1xf32>
      %118 = arith.mulf %115, %115 : vector<8x1xf32>
      %119 = arith.subf %117, %118 : vector<8x1xf32>
      %cst_61 = arith.constant 1.000000e-01 : f32
      %120 = vector.broadcast %cst_61 : f32 to vector<8x1xf32>
      %121 = arith.addf %119, %120 : vector<8x1xf32>
      %122 = math.rsqrt %121 : vector<8x1xf32>
      %123 = vector.broadcast %115 : vector<8x1xf32> to vector<8x128xf32>
      %124 = arith.subf %106, %123 : vector<8x128xf32>
      %125 = vector.broadcast %122 : vector<8x1xf32> to vector<8x128xf32>
      %126 = arith.mulf %124, %125 : vector<8x128xf32>
      %127 = vector.broadcast %107 : vector<1x128xf32> to vector<8x128xf32>
      %128 = arith.mulf %126, %127 : vector<8x128xf32>
      %129 = vector.broadcast %108 : vector<1x128xf32> to vector<8x128xf32>
      %130 = arith.addf %128, %129 : vector<8x128xf32>
      %c0_62 = arith.constant 0 : index
      %c0_63 = arith.constant 0 : index
      %131 = vector.load %arg15[%c0_62, %c0_63] : memref<128x128xf32, #tpu.memory_space<vmem>>, vector<128x128xf32>
      %cst_64 = arith.constant dense<0.000000e+00> : vector<8x128xf32>
      %132 = tpu.matmul %130, %131, %cst_64 {dimension_numbers = #tpu.dot_dimension_numbers<[1], [0], [0], [1], [0, 0, 1, 1], [], []>} : vector<8x128xf32>, vector<128x128xf32>, vector<8x128xf32> -> vector<8x128xf32>
      %c0_65 = arith.constant 0 : index
      %c0_66 = arith.constant 0 : index
      %133 = vector.load %arg16[%c0_65, %c0_66] : memref<1x128xf32, #tpu.memory_space<vmem>>, vector<1x128xf32>
      %134 = vector.broadcast %133 : vector<1x128xf32> to vector<8x128xf32>
      %135 = arith.addf %132, %134 : vector<8x128xf32>
      %c0_67 = arith.constant 0 : index
      %c0_68 = arith.constant 0 : index
      %136 = vector.load %arg17[%c0_67, %c0_68] : memref<8x128xf32, #tpu.memory_space<vmem>>, vector<8x128xf32>
      tpu.vector_store %arg17[%c0_67, %c0_68], %135 {strides = array<i32>} : memref<8x128xf32, #tpu.memory_space<vmem>>, vector<8x128xf32>,
    } else {
    }
    return
  }
  func.func @transform_0(%arg0: i32, %arg1: i32) -> (i32, i32) {
    %c0_i32 = arith.constant 0 : i32
    return %arg0, %arg1 : i32, i32
  }
  func.func @transform_1(%arg0: i32, %arg1: i32) -> (i32, i32) {
    %c0_i32 = arith.constant 0 : i32
    %c0_i32_0 = arith.constant 0 : i32
    return %arg1, %c0_i32 : i32, i32
  }
  func.func @transform_2(%arg0: i32, %arg1: i32) -> (i32, i32) {
    %c0_i32 = arith.constant 0 : i32
    %c0_i32_0 = arith.constant 0 : i32
    %c0_i32_1 = arith.constant 0 : i32
    return %c0_i32, %c0_i32_0 : i32, i32
  }
  func.func @transform_3(%arg0: i32, %arg1: i32) -> (i32, i32) {
    %c0_i32 = arith.constant 0 : i32
    %c0_i32_0 = arith.constant 0 : i32
    %c0_i32_1 = arith.constant 0 : i32
    return %c0_i32, %c0_i32_0 : i32, i32
  }
  func.func @transform_4(%arg0: i32, %arg1: i32) -> (i32, i32) {
    %c0_i32 = arith.constant 0 : i32
    %c0_i32_0 = arith.constant 0 : i32
    %c0_i32_1 = arith.constant 0 : i32
    return %c0_i32, %c0_i32_0 : i32, i32
  }
  func.func @transform_5(%arg0: i32, %arg1: i32) -> (i32, i32) {
    %c0_i32 = arith.constant 0 : i32
    %c0_i32_0 = arith.constant 0 : i32
    %c0_i32_1 = arith.constant 0 : i32
    return %c0_i32, %c0_i32_0 : i32, i32
  }
  func.func @transform_6(%arg0: i32, %arg1: i32) -> (i32, i32) {
    %c0_i32 = arith.constant 0 : i32
    %c0_i32_0 = arith.constant 0 : i32
    %c0_i32_1 = arith.constant 0 : i32
    return %c0_i32, %c0_i32_0 : i32, i32
  }
  func.func @transform_7(%arg0: i32, %arg1: i32) -> (i32, i32) {
    %c0_i32 = arith.constant 0 : i32
    %c0_i32_0 = arith.constant 0 : i32
    %c0_i32_1 = arith.constant 0 : i32
    return %c0_i32, %c0_i32_0 : i32, i32
  }
  func.func @transform_8(%arg0: i32, %arg1: i32) -> (i32, i32) {
    %c0_i32 = arith.constant 0 : i32
    %c0_i32_0 = arith.constant 0 : i32
    %c0_i32_1 = arith.constant 0 : i32
    return %c0_i32, %c0_i32_0 : i32, i32
  }
  func.func @transform_9(%arg0: i32, %arg1: i32) -> (i32, i32) {
    %c0_i32 = arith.constant 0 : i32
    %c0_i32_0 = arith.constant 0 : i32
    %c0_i32_1 = arith.constant 0 : i32
    return %c0_i32, %c0_i32_0 : i32, i32
  }
  func.func @transform_10(%arg0: i32, %arg1: i32) -> (i32, i32) {
    %c0_i32 = arith.constant 0 : i32
    %c0_i32_0 = arith.constant 0 : i32
    %c0_i32_1 = arith.constant 0 : i32
    return %c0_i32, %c0_i32_0 : i32, i32
  }
  func.func @transform_11(%arg0: i32, %arg1: i32) -> (i32, i32) {
    %c0_i32 = arith.constant 0 : i32
    %c0_i32_0 = arith.constant 0 : i32
    %c0_i32_1 = arith.constant 0 : i32
    return %c0_i32, %c0_i32_0 : i32, i32
  }
  func.func @transform_12(%arg0: i32, %arg1: i32) -> (i32, i32) {
    %c0_i32 = arith.constant 0 : i32
    %c0_i32_0 = arith.constant 0 : i32
    %c0_i32_1 = arith.constant 0 : i32
    return %c0_i32, %c0_i32_0 : i32, i32
  }
  func.func @transform_13(%arg0: i32, %arg1: i32) -> (i32, i32) {
    %c0_i32 = arith.constant 0 : i32
    %c0_i32_0 = arith.constant 0 : i32
    %c0_i32_1 = arith.constant 0 : i32
    return %c0_i32, %c0_i32_0 : i32, i32
  }
  func.func @transform_14(%arg0: i32, %arg1: i32) -> (i32, i32) {
    %c0_i32 = arith.constant 0 : i32
    %c0_i32_0 = arith.constant 0 : i32
    %c0_i32_1 = arith.constant 0 : i32
    return %c0_i32, %c0_i32_0 : i32, i32
  }
  func.func @transform_15(%arg0: i32, %arg1: i32) -> (i32, i32) {
    %c0_i32 = arith.constant 0 : i32
    %c0_i32_0 = arith.constant 0 : i32
    return %arg0, %c0_i32 : i32, i32
  }
}

</mosaic_0001>

<llo_original>
// kernel: tpu_custom_call.1
$region0: #{tpu_custom_call.1}
  #allocation0 [shape = 'u32[]', space=smem, size = 0x4, offset = 0x4, fixed_abs, tag = 'smem constant byte address 0x4 - core index']
  #allocation1 [shape = 'u32[144,128]{1,0:T(1,128)}', space=vmem, size = 0x12000, scoped, tag = 'internal scratch']
  #allocation2 [shape = 'f32[8,128]{1,0:T(8,128)}', space=vmem, size = 0x1000, scoped, tag = 'scratch operand']
  #allocation3 [shape = 'f32[8,1]{1,0:T(8,128)}', space=vmem, size = 0x1000, scoped, tag = 'scratch operand']
  %s0 = inlined_call_operand.hbm [shape: f32[8,128], index: 0, kind: input, shape index: {}]
  %s1 = inlined_call_operand.hbm [shape: f32[128,128], index: 1, kind: input, shape index: {}]
  %s2 = inlined_call_operand.vmem [shape: f32[1,128], index: 2, kind: input, shape index: {}]
  %s3 = inlined_call_operand.vmem [shape: f32[1,128], index: 3, kind: input, shape index: {}]
  %s4 = inlined_call_operand.vmem [shape: f32[1,128], index: 4, kind: input, shape index: {}]
  %s5 = inlined_call_operand.hbm [shape: f32[128,128], index: 5, kind: input, shape index: {}]
  %s6 = inlined_call_operand.vmem [shape: f32[1,128], index: 6, kind: input, shape index: {}]
  %s7 = inlined_call_operand.vmem [shape: f32[1,128], index: 7, kind: input, shape index: {}]
  %s8 = inlined_call_operand.vmem [shape: f32[1,128], index: 8, kind: input, shape index: {}]
  %s9 = inlined_call_operand.hbm [shape: f32[128,128], index: 9, kind: input, shape index: {}]
  %s10 = inlined_call_operand.vmem [shape: f32[1,128], index: 10, kind: input, shape index: {}]
  %s11 = inlined_call_operand.vmem [shape: f32[1,128], index: 11, kind: input, shape index: {}]
  %s12 = inlined_call_operand.vmem [shape: f32[1,128], index: 12, kind: input, shape index: {}]
  %s13 = inlined_call_operand.hbm [shape: f32[128,128], index: 13, kind: input, shape index: {}]
  %s14 = inlined_call_operand.vmem [shape: f32[1,128], index: 14, kind: input, shape index: {}]
  %s15 = inlined_call_operand.hbm [shape: f32[8,128], index: 15, kind: output, shape index: {}]
  %s16 = sld [smem:[#allocation0]]
  $region98: #{tpu_custom_call.1} parent=0
    _
  %s18 = ssub.s32 1, %s16
  %s19 = scalar_select 0, %s18, %s16
  $region1: #{tpu_custom_call.1} parent=0
    #allocation4 [shape = 'u8[4096]{0}', space=vmem, size = 0x1000, scoped, tag = 'input window, operand 0, single buffered']
    #allocation5 [shape = 's32[1]{0}', space=sflag, size = 0x4, scoped, tag = 'scoped memory for tpu_custom_call.1']
    #allocation6 [shape = 's32[1]{0}', space=sflag, size = 0x4, scoped, tag = 'scoped memory for tpu_custom_call.1']
    #allocation7 [shape = 'u8[65536]{0}', space=vmem, size = 0x10000, scoped, tag = 'input window, operand 1, single buffered']
    #allocation8 [shape = 's32[1]{0}', space=sflag, size = 0x4, scoped, tag = 'scoped memory for tpu_custom_call.1']
    #allocation9 [shape = 'u8[65536]{0}', space=vmem, size = 0x10000, scoped, tag = 'input window, operand 5, single buffered']
    #allocation10 [shape = 'u8[65536]{0}', space=vmem, size = 0x10000, scoped, tag = 'input window, operand 9, single buffered']
    #allocation11 [shape = 's32[1]{0}', space=sflag, size = 0x4, scoped, tag = 'scoped memory for tpu_custom_call.1']
    #allocation12 [shape = 'u8[65536]{0}', space=vmem, size = 0x10000, scoped, tag = 'input window, operand 13, single buffered']
    #allocation13 [shape = 'u8[4096]{0}', space=vmem, size = 0x1000, scoped, tag = 'output window, operand 0, single buffered']
    %20 = vsyncpa [#allocation5], 0
    %21 = vsyncpa [#allocation8], 0
    %22 = vsyncpa [#allocation11], 0
    %23 = vsyncpa [#allocation6], 0
    // Predicated region
    $region2: #{tpu_custom_call.1} parent=1 // pred_check
      _
    $region3: #{tpu_custom_call.1} parent=1 // pred_check_branch
      %25 = sbr.rel (0) target = $region5
    $region4: #{tpu_custom_call.1} parent=1 // pred_region
      %s27 = ssub.s32 128, 128
      %28 = vsyncadd [#allocation5], %s27
      %s30 = sshll.u32 [#allocation4], 4
      %s31 = int_to_ptr.vmem [resolvable:$true] %s30
      %33 = dma.hbm_to_vmem [thread:$0]  %s0, 128, %s31, [#allocation5]
    $region5: #{tpu_custom_call.1} parent=1 // pred_fallthru
      _
    // Predicated region
    $region6: #{tpu_custom_call.1} parent=1 // pred_check
      _
    $region7: #{tpu_custom_call.1} parent=1 // pred_check_branch
      %35 = sbr.rel (0) target = $region9
    $region8: #{tpu_custom_call.1} parent=1 // pred_region
      %s37 = ssub.s32 2048, 2048
      %38 = vsyncadd [#allocation8], %s37
      %s39 = sshll.u32 [#allocation7], 4
      %s40 = int_to_ptr.vmem [resolvable:$true] %s39
      %45 = dma.hbm_to_vmem [thread:$0]  %s1, 2048, %s40, [#allocation8], 128, 128, 8
    $region9: #{tpu_custom_call.1} parent=1 // pred_fallthru
      _
    // Predicated region
    $region10: #{tpu_custom_call.1} parent=1 // pred_check
      _
    $region11: #{tpu_custom_call.1} parent=1 // pred_check_branch
      %47 = sbr.rel (0) target = $region13
    $region12: #{tpu_custom_call.1} parent=1 // pred_region
      _
    $region13: #{tpu_custom_call.1} parent=1 // pred_fallthru
      _
    // Predicated region
    $region14: #{tpu_custom_call.1} parent=1 // pred_check
      _
    $region15: #{tpu_custom_call.1} parent=1 // pred_check_branch
      %49 = sbr.rel (0) target = $region17
    $region16: #{tpu_custom_call.1} parent=1 // pred_region
      _
    $region17: #{tpu_custom_call.1} parent=1 // pred_fallthru
      _
    // Predicated region
    $region18: #{tpu_custom_call.1} parent=1 // pred_check
      _
    $region19: #{tpu_custom_call.1} parent=1 // pred_check_branch
      %51 = sbr.rel (0) target = $region21
    $region20: #{tpu_custom_call.1} parent=1 // pred_region
      _
    $region21: #{tpu_custom_call.1} parent=1 // pred_fallthru
      _
    // Predicated region
    $region22: #{tpu_custom_call.1} parent=1 // pred_check
      _
    $region23: #{tpu_custom_call.1} parent=1 // pred_check_branch
      %53 = sbr.rel (0) target = $region25
    $region24: #{tpu_custom_call.1} parent=1 // pred_region
      %s55 = ssub.s32 2048, 2048
      %56 = vsyncadd [#allocation8], %s55
      %s57 = sshll.u32 [#allocation9], 4
      %s58 = int_to_ptr.vmem [resolvable:$true] %s57
      %63 = dma.hbm_to_vmem [thread:$0]  %s5, 2048, %s58, [#allocation8], 128, 128, 8
    $region25: #{tpu_custom_call.1} parent=1 // pred_fallthru
      _
    // Predicated region
    $region26: #{tpu_custom_call.1} parent=1 // pred_check
      _
    $region27: #{tpu_custom_call.1} parent=1 // pred_check_branch
      %65 = sbr.rel (0) target = $region29
    $region28: #{tpu_custom_call.1} parent=1 // pred_region
      _
    $region29: #{tpu_custom_call.1} parent=1 // pred_fallthru
      _
    // Predicated region
    $region30: #{tpu_custom_call.1} parent=1 // pred_check
      _
    $region31: #{tpu_custom_call.1} parent=1 // pred_check_branch
      %67 = sbr.rel (0) target = $region33
    $region32: #{tpu_custom_call.1} parent=1 // pred_region
      _
    $region33: #{tpu_custom_call.1} parent=1 // pred_fallthru
      _
    // Predicated region
    $region34: #{tpu_custom_call.1} parent=1 // pred_check
      _
    $region35: #{tpu_custom_call.1} parent=1 // pred_check_branch
      %69 = sbr.rel (0) target = $region37
    $region36: #{tpu_custom_call.1} parent=1 // pred_region
      _
    $region37: #{tpu_custom_call.1} parent=1 // pred_fallthru
      _
    // Predicated region
    $region38: #{tpu_custom_call.1} parent=1 // pred_check
      _
    $region39: #{tpu_custom_call.1} parent=1 // pred_check_branch
      %71 = sbr.rel (0) target = $region41
    $region40: #{tpu_custom_call.1} parent=1 // pred_region
      %s73 = ssub.s32 2048, 2048
      %74 = vsyncadd [#allocation11], %s73
      %s75 = sshll.u32 [#allocation10], 4
      %s76 = int_to_ptr.vmem [resolvable:$true] %s75
      %81 = dma.hbm_to_vmem [thread:$0]  %s9, 2048, %s76, [#allocation11], 128, 128, 8
    $region41: #{tpu_custom_call.1} parent=1 // pred_fallthru
      _
    // Predicated region
    $region42: #{tpu_custom_call.1} parent=1 // pred_check
      _
    $region43: #{tpu_custom_call.1} parent=1 // pred_check_branch
      %83 = sbr.rel (0) target = $region45
    $region44: #{tpu_custom_call.1} parent=1 // pred_region
      _
    $region45: #{tpu_custom_call.1} parent=1 // pred_fallthru
      _
    // Predicated region
    $region46: #{tpu_custom_call.1} parent=1 // pred_check
      _
    $region47: #{tpu_custom_call.1} parent=1 // pred_check_branch
      %85 = sbr.rel (0) target = $region49
    $region48: #{tpu_custom_call.1} parent=1 // pred_region
      _
    $region49: #{tpu_custom_call.1} parent=1 // pred_fallthru
      _
    // Predicated region
    $region50: #{tpu_custom_call.1} parent=1 // pred_check
      _
    $region51: #{tpu_custom_call.1} parent=1 // pred_check_branch
      %87 = sbr.rel (0) target = $region53
    $region52: #{tpu_custom_call.1} parent=1 // pred_region
      _
    $region53: #{tpu_custom_call.1} parent=1 // pred_fallthru
      _
    // Predicated region
    $region54: #{tpu_custom_call.1} parent=1 // pred_check
      _
    $region55: #{tpu_custom_call.1} parent=1 // pred_check_branch
      %89 = sbr.rel (0) target = $region57
    $region56: #{tpu_custom_call.1} parent=1 // pred_region
      %s91 = ssub.s32 2048, 2048
      %92 = vsyncadd [#allocation11], %s91
      %s93 = sshll.u32 [#allocation12], 4
      %s94 = int_to_ptr.vmem [resolvable:$true] %s93
      %99 = dma.hbm_to_vmem [thread:$0]  %s13, 2048, %s94, [#allocation11], 128, 128, 8
    $region57: #{tpu_custom_call.1} parent=1 // pred_fallthru
      _
    // Predicated region
    $region58: #{tpu_custom_call.1} parent=1 // pred_check
      _
    $region59: #{tpu_custom_call.1} parent=1 // pred_check_branch
      %101 = sbr.rel (0) target = $region61
    $region60: #{tpu_custom_call.1} parent=1 // pred_region
      _
    $region61: #{tpu_custom_call.1} parent=1 // pred_fallthru
      _
    // Predicated region
    $region62: #{tpu_custom_call.1} parent=1 // pred_check
      _
    $region63: #{tpu_custom_call.1} parent=1 // pred_check_branch
      %103 = sbr.rel (0) target = $region65
    $region64: #{tpu_custom_call.1} parent=1 // pred_region
      %104 = dma.done [#allocation5], 128
    $region65: #{tpu_custom_call.1} parent=1 // pred_fallthru
      _
    // Predicated region
    $region66: #{tpu_custom_call.1} parent=1 // pred_check
      _
    $region67: #{tpu_custom_call.1} parent=1 // pred_check_branch
      %106 = sbr.rel (0) target = $region69
    $region68: #{tpu_custom_call.1} parent=1 // pred_region
      %107 = dma.done [#allocation8], 2048
    $region69: #{tpu_custom_call.1} parent=1 // pred_fallthru
      _
    // Predicated region
    $region70: #{tpu_custom_call.1} parent=1 // pred_check
      _
    $region71: #{tpu_custom_call.1} parent=1 // pred_check_branch
      %109 = sbr.rel (0) target = $region73
    $region72: #{tpu_custom_call.1} parent=1 // pred_region
      %110 = dma.done [#allocation8], 2048
    $region73: #{tpu_custom_call.1} parent=1 // pred_fallthru
      _
    // Predicated region
    $region74: #{tpu_custom_call.1} parent=1 // pred_check
      _
    $region75: #{tpu_custom_call.1} parent=1 // pred_check_branch
      %112 = sbr.rel (0) target = $region77
    $region76: #{tpu_custom_call.1} parent=1 // pred_region
      %113 = dma.done [#allocation11], 2048
    $region77: #{tpu_custom_call.1} parent=1 // pred_fallthru
      _
    // Predicated region
    $region78: #{tpu_custom_call.1} parent=1 // pred_check
      _
    $region79: #{tpu_custom_call.1} parent=1 // pred_check_branch
      %115 = sbr.rel (0) target = $region81
    $region80: #{tpu_custom_call.1} parent=1 // pred_region
      %116 = dma.done [#allocation11], 2048
    $region81: #{tpu_custom_call.1} parent=1 // pred_fallthru
      _
    %p117 = scmp.eq.s32.totalorder 0, 0
    // Predicated region
    $region82: #{tpu_custom_call.1} parent=1 // pred_check
      %p118 = pneg %p117
    $region83: #{tpu_custom_call.1} parent=1 // pred_check_branch
      %120 = sbr.rel (%p118) target = $region85
    $region84: #{tpu_custom_call.1} parent=1 // pred_region
      %121 = vst [vmem:[#allocation2] sm:$0xff] 0.0
      %vm122 = vcmask 7168
      %123 = vst.msk [vmem:[#allocation3] sm:$0xff] %vm122, 0.0
    $region85: #{tpu_custom_call.1} parent=1 // pred_fallthru
      _
    %v124 = vld [vmem:[#allocation4] sm:$0xff]
    %v125 = vld [vmem:[#allocation3] sm:$0xff]
    %v126 = vmul.f32 %v124, %v124
    %127 = vadd.xlane.f32.xlu0 %v126
    %v128 = vpop.xlane.xlu0 %127
    %v129 = vadd.f32 %v125, %v128
    %vm130 = vcmask 7168
    %131 = vst.msk [vmem:[#allocation3] sm:$0xff] %vm130, %v129
    %v132 = vld [vmem:[#allocation2] sm:$0xff]
    %v133 = vld [vmem:[#allocation7] sm:$0xff]
    %v134 = vld [vmem:[#allocation7 + $0x8] sm:$0xff]
    %v135 = vld [vmem:[#allocation7 + $0x10] sm:$0xff]
    %v136 = vld [vmem:[#allocation7 + $0x18] sm:$0xff]
    %v137 = vld [vmem:[#allocation7 + $0x20] sm:$0xff]
    %v138 = vld [vmem:[#allocation7 + $0x28] sm:$0xff]
    %v139 = vld [vmem:[#allocation7 + $0x30] sm:$0xff]
    %v140 = vld [vmem:[#allocation7 + $0x38] sm:$0xff]
    %v141 = vld [vmem:[#allocation7 + $0x40] sm:$0xff]
    %v142 = vld [vmem:[#allocation7 + $0x48] sm:$0xff]
    %v143 = vld [vmem:[#allocation7 + $0x50] sm:$0xff]
    %v144 = vld [vmem:[#allocation7 + $0x58] sm:$0xff]
    %v145 = vld [vmem:[#allocation7 + $0x60] sm:$0xff]
    %v146 = vld [vmem:[#allocation7 + $0x68] sm:$0xff]
    %v147 = vld [vmem:[#allocation7 + $0x70] sm:$0xff]
    %v148 = vld [vmem:[#allocation7 + $0x78] sm:$0xff]
    %149 = vmatprep.subr.mxu0 0.0
    %150 = vmatpush1.msra.mxu0 %v148
    %151 = vmatprep.subr.mxu0 0.0
    %152 = vmatpush1.msra.mxu0 %v147
    %153 = vmatprep.subr.mxu0 0.0
    %154 = vmatpush1.msra.mxu0 %v146
    %155 = vmatprep.subr.mxu0 0.0
    %156 = vmatpush1.msra.mxu0 %v145
    %157 = vmatprep.subr.mxu0 0.0
    %158 = vmatpush1.msra.mxu0 %v144
    %159 = vmatprep.subr.mxu0 0.0
    %160 = vmatpush1.msra.mxu0 %v143
    %161 = vmatprep.subr.mxu0 0.0
    %162 = vmatpush1.msra.mxu0 %v142
    %163 = vmatprep.subr.mxu0 0.0
    %164 = vmatpush1.msra.mxu0 %v141
    %165 = vmatprep.subr.mxu0 0.0
    %166 = vmatpush1.msra.mxu0 %v140
    %167 = vmatprep.subr.mxu0 0.0
    %168 = vmatpush1.msra.mxu0 %v139
    %169 = vmatprep.subr.mxu0 0.0
    %170 = vmatpush1.msra.mxu0 %v138
    %171 = vmatprep.subr.mxu0 0.0
    %172 = vmatpush1.msra.mxu0 %v137
    %173 = vmatprep.subr.mxu0 0.0
    %174 = vmatpush1.msra.mxu0 %v136
    %175 = vmatprep.subr.mxu0 0.0
    %176 = vmatpush1.msra.mxu0 %v135
    %177 = vmatprep.subr.mxu0 0.0
    %178 = vmatpush1.msra.mxu0 %v134
    %179 = vmatprep.subr.mxu0 0.0
    %180 = vmatpush1.msra.mxu0 %v133
    %181 = vmatprep.subr.mxu0 0.0
    %182 = vmatpush2.msra.mxu0 0.0
    %183 = vmatprep.subr.mxu0 0.0
    %184 = vmatpush2.msra.mxu0 0.0
    %185 = vmatprep.subr.mxu0 0.0
    %186 = vmatpush2.msra.mxu0 0.0
    %187 = vmatprep.subr.mxu0 0.0
    %188 = vmatpush2.msra.mxu0 0.0
    %189 = vmatprep.subr.mxu0 0.0
    %190 = vmatpush2.msra.mxu0 0.0
    %191 = vmatprep.subr.mxu0 0.0
    %192 = vmatpush2.msra.mxu0 0.0
    %193 = vmatprep.subr.mxu0 0.0
    %194 = vmatpush2.msra.mxu0 0.0
    %195 = vmatprep.subr.mxu0 0.0
    %196 = vmatpush2.msra.mxu0 0.0
    %197 = vmatprep.subr.mxu0 0.0
    %198 = vmatpush2.msra.mxu0 0.0
    %199 = vmatprep.subr.mxu0 0.0
    %200 = vmatpush2.msra.mxu0 0.0
    %201 = vmatprep.subr.mxu0 0.0
    %202 = vmatpush2.msra.mxu0 0.0
    %203 = vmatprep.subr.mxu0 0.0
    %204 = vmatpush2.msra.mxu0 0.0
    %205 = vmatprep.subr.mxu0 0.0
    %206 = vmatpush2.msra.mxu0 0.0
    %207 = vmatprep.subr.mxu0 0.0
    %208 = vmatpush2.msra.mxu0 0.0
    %209 = vmatprep.subr.mxu0 0.0
    %210 = vmatpush2.msra.mxu0 0.0
    %211 = vmatprep.subr.mxu0 0.0
    %212 = vmatpush2.msra.mxu0 0.0
    %213 = vmatprep.mubr.f32.mxu0 0.0
    %214 = vmatmul.mubr.f32.gmra.mxu0 %v124
    %v215 = vpop.f32.mrf.mxu0
    %v216 = vadd.f32 0.0, %v215
    %v217 = vpop.f32.mrf.mxu0
    %218 = vdwg.mxu0
    %v219 = vadd.f32 %v132, %v216
    %220 = vst [vmem:[#allocation2] sm:$0xff] %v219
    // Predicated region
    $region86: #{tpu_custom_call.1} parent=1 // pred_check
      %p221 = pneg %p117
    $region87: #{tpu_custom_call.1} parent=1 // pred_check_branch
      %223 = sbr.rel (%p221) target = $region89
    $region88: #{tpu_custom_call.1} parent=1 // pred_region
      %v224 = vld [vmem:[#allocation3] sm:$0xff]
      %v225 = vmax.f32 %v224, 1e-24
      %v226 = vrsqrt.pop %v225
      %v227 = vld [vmem:[#allocation2] sm:$0xff]
      %229 = vset.pattern.permute.xlu0 0
      %230 = vperm.xlu0 %229, %v226
      %v231 = vpop.permute.xlu0 %230
      %v233 = vmul.f32 %v227, %v231
      %v234 = vld [vmem:[%s2] sm:$0x1]
      %v236 = vlaneseq
      %v237 = vshrl.u32 %v236, 7
      %v238 = vsub.s32 0, %v237
      %v239 = vrot.slane %v234, %v238
      %v241 = vadd.f32 %v233, %v239
      %v242 = vxor.u32 %v241, 2147483648
      %v243 = vmul.f32 %v242, 1.442695
      %v244 = vpow.pop %v243
      %v245 = vadd.f32 %v244, 1.0
      %v246 = vrcp.pop %v245
      %v247 = vmul.f32 1.0, %v246
      %v248 = vmul.f32 %v241, %v247
      %v249 = vld [vmem:[%s3] sm:$0x1]
      %v250 = vld [vmem:[%s4] sm:$0x1]
      %251 = vadd.xlane.f32.xlu0 %v248
      %v252 = vpop.xlane.xlu0 %251
      %v253 = vmul.f32 %v248, %v248
      %254 = vadd.xlane.f32.xlu0 %v253
      %v255 = vpop.xlane.xlu0 %254
      %v256 = vmul.f32 %v252, 0.03125
      %v257 = vmul.f32 %v255, 0.03125
      %v258 = vmul.f32 %v256, %v256
      %v259 = vsub.f32 %v257, %v258
      %v260 = vadd.f32 %v259, 0.1
      %v261 = vrsqrt.pop %v260
      %v262 = vsub.f32 %v248, %v256
      %v263 = vmul.f32 %v262, %v261
      %v265 = vlaneseq
      %v266 = vshrl.u32 %v265, 7
      %v267 = vsub.s32 0, %v266
      %v268 = vrot.slane %v249, %v267
      %v270 = vmul.f32 %v263, %v268
      %v272 = vlaneseq
      %v273 = vshrl.u32 %v272, 7
      %v274 = vsub.s32 0, %v273
      %v275 = vrot.slane %v250, %v274
      %v277 = vadd.f32 %v270, %v275
      %v278 = vld [vmem:[#allocation9] sm:$0xff]
      %v279 = vld [vmem:[#allocation9 + $0x8] sm:$0xff]
      %v280 = vld [vmem:[#allocation9 + $0x10] sm:$0xff]
      %v281 = vld [vmem:[#allocation9 + $0x18] sm:$0xff]
      %v282 = vld [vmem:[#allocation9 + $0x20] sm:$0xff]
      %v283 = vld [vmem:[#allocation9 + $0x28] sm:$0xff]
      %v284 = vld [vmem:[#allocation9 + $0x30] sm:$0xff]
      %v285 = vld [vmem:[#allocation9 + $0x38] sm:$0xff]
      %v286 = vld [vmem:[#allocation9 + $0x40] sm:$0xff]
      %v287 = vld [vmem:[#allocation9 + $0x48] sm:$0xff]
      %v288 = vld [vmem:[#allocation9 + $0x50] sm:$0xff]
      %v289 = vld [vmem:[#allocation9 + $0x58] sm:$0xff]
      %v290 = vld [vmem:[#allocation9 + $0x60] sm:$0xff]
      %v291 = vld [vmem:[#allocation9 + $0x68] sm:$0xff]
      %v292 = vld [vmem:[#allocation9 + $0x70] sm:$0xff]
      %v293 = vld [vmem:[#allocation9 + $0x78] sm:$0xff]
      %v294 = vld [vmem:[%s6] sm:$0x1]
      %v296 = vlaneseq
      %v297 = vshrl.u32 %v296, 7
      %v298 = vsub.s32 0, %v297
      %v299 = vrot.slane %v294, %v298
      %301 = vmatprep.subr.mxu0 0.0
      %302 = vmatpush1.msra.mxu0 %v293
      %303 = vmatprep.subr.mxu0 0.0
      %304 = vmatpush1.msra.mxu0 %v292
      %305 = vmatprep.subr.mxu0 0.0
      %306 = vmatpush1.msra.mxu0 %v291
      %307 = vmatprep.subr.mxu0 0.0
      %308 = vmatpush1.msra.mxu0 %v290
      %309 = vmatprep.subr.mxu0 0.0
      %310 = vmatpush1.msra.mxu0 %v289
      %311 = vmatprep.subr.mxu0 0.0
      %312 = vmatpush1.msra.mxu0 %v288
      %313 = vmatprep.subr.mxu0 0.0
      %314 = vmatpush1.msra.mxu0 %v287
      %315 = vmatprep.subr.mxu0 0.0
      %316 = vmatpush1.msra.mxu0 %v286
      %317 = vmatprep.subr.mxu0 0.0
      %318 = vmatpush1.msra.mxu0 %v285
      %319 = vmatprep.subr.mxu0 0.0
      %320 = vmatpush1.msra.mxu0 %v284
      %321 = vmatprep.subr.mxu0 0.0
      %322 = vmatpush1.msra.mxu0 %v283
      %323 = vmatprep.subr.mxu0 0.0
      %324 = vmatpush1.msra.mxu0 %v282
      %325 = vmatprep.subr.mxu0 0.0
      %326 = vmatpush1.msra.mxu0 %v281
      %327 = vmatprep.subr.mxu0 0.0
      %328 = vmatpush1.msra.mxu0 %v280
      %329 = vmatprep.subr.mxu0 0.0
      %330 = vmatpush1.msra.mxu0 %v279
      %331 = vmatprep.subr.mxu0 0.0
      %332 = vmatpush1.msra.mxu0 %v278
      %333 = vmatprep.subr.mxu0 0.0
      %334 = vmatpush2.msra.mxu0 0.0
      %335 = vmatprep.subr.mxu0 0.0
      %336 = vmatpush2.msra.mxu0 0.0
      %337 = vmatprep.subr.mxu0 0.0
      %338 = vmatpush2.msra.mxu0 0.0
      %339 = vmatprep.subr.mxu0 0.0
      %340 = vmatpush2.msra.mxu0 0.0
      %341 = vmatprep.subr.mxu0 0.0
      %342 = vmatpush2.msra.mxu0 0.0
      %343 = vmatprep.subr.mxu0 0.0
      %344 = vmatpush2.msra.mxu0 0.0
      %345 = vmatprep.subr.mxu0 0.0
      %346 = vmatpush2.msra.mxu0 0.0
      %347 = vmatprep.subr.mxu0 0.0
      %348 = vmatpush2.msra.mxu0 0.0
      %349 = vmatprep.subr.mxu0 0.0
      %350 = vmatpush2.msra.mxu0 0.0
      %351 = vmatprep.subr.mxu0 0.0
      %352 = vmatpush2.msra.mxu0 0.0
      %353 = vmatprep.subr.mxu0 0.0
      %354 = vmatpush2.msra.mxu0 0.0
      %355 = vmatprep.subr.mxu0 0.0
      %356 = vmatpush2.msra.mxu0 0.0
      %357 = vmatprep.subr.mxu0 0.0
      %358 = vmatpush2.msra.mxu0 0.0
      %359 = vmatprep.subr.mxu0 0.0
      %360 = vmatpush2.msra.mxu0 0.0
      %361 = vmatprep.subr.mxu0 0.0
      %362 = vmatpush2.msra.mxu0 0.0
      %363 = vmatprep.subr.mxu0 0.0
      %364 = vmatpush2.msra.mxu0 0.0
      %365 = vmatprep.mubr.f32.mxu0 0.0
      %366 = vmatmul.mubr.f32.gmra.mxu0 %v277
      %v367 = vpop.f32.mrf.mxu0
      %v368 = vadd.f32 %v299, %v367
      %v369 = vpop.f32.mrf.mxu0
      %370 = vdwg.mxu0
      %v371 = vadd.f32 %v368, %v277
      %v372 = vxor.u32 %v371, 2147483648
      %v373 = vmul.f32 %v372, 1.442695
      %v374 = vpow.pop %v373
      %v375 = vadd.f32 %v374, 1.0
      %v376 = vrcp.pop %v375
      %v377 = vmul.f32 1.0, %v376
      %v378 = vmul.f32 %v371, %v377
      %v379 = vld [vmem:[%s7] sm:$0x1]
      %v380 = vld [vmem:[%s8] sm:$0x1]
      %381 = vadd.xlane.f32.xlu0 %v378
      %v382 = vpop.xlane.xlu0 %381
      %v383 = vmul.f32 %v378, %v378
      %384 = vadd.xlane.f32.xlu0 %v383
      %v385 = vpop.xlane.xlu0 %384
      %v386 = vmul.f32 %v382, 0.03125
      %v387 = vmul.f32 %v385, 0.03125
      %v388 = vmul.f32 %v386, %v386
      %v389 = vsub.f32 %v387, %v388
      %v390 = vadd.f32 %v389, 0.1
      %v391 = vrsqrt.pop %v390
      %v392 = vsub.f32 %v378, %v386
      %v393 = vmul.f32 %v392, %v391
      %v395 = vlaneseq
      %v396 = vshrl.u32 %v395, 7
      %v397 = vsub.s32 0, %v396
      %v398 = vrot.slane %v379, %v397
      %v400 = vmul.f32 %v393, %v398
      %v402 = vlaneseq
      %v403 = vshrl.u32 %v402, 7
      %v404 = vsub.s32 0, %v403
      %v405 = vrot.slane %v380, %v404
      %v407 = vadd.f32 %v400, %v405
      %v408 = vld [vmem:[#allocation10] sm:$0xff]
      %v409 = vld [vmem:[#allocation10 + $0x8] sm:$0xff]
      %v410 = vld [vmem:[#allocation10 + $0x10] sm:$0xff]
      %v411 = vld [vmem:[#allocation10 + $0x18] sm:$0xff]
      %v412 = vld [vmem:[#allocation10 + $0x20] sm:$0xff]
      %v413 = vld [vmem:[#allocation10 + $0x28] sm:$0xff]
      %v414 = vld [vmem:[#allocation10 + $0x30] sm:$0xff]
      %v415 = vld [vmem:[#allocation10 + $0x38] sm:$0xff]
      %v416 = vld [vmem:[#allocation10 + $0x40] sm:$0xff]
      %v417 = vld [vmem:[#allocation10 + $0x48] sm:$0xff]
      %v418 = vld [vmem:[#allocation10 + $0x50] sm:$0xff]
      %v419 = vld [vmem:[#allocation10 + $0x58] sm:$0xff]
      %v420 = vld [vmem:[#allocation10 + $0x60] sm:$0xff]
      %v421 = vld [vmem:[#allocation10 + $0x68] sm:$0xff]
      %v422 = vld [vmem:[#allocation10 + $0x70] sm:$0xff]
      %v423 = vld [vmem:[#allocation10 + $0x78] sm:$0xff]
      %v424 = vld [vmem:[%s10] sm:$0x1]
      %v426 = vlaneseq
      %v427 = vshrl.u32 %v426, 7
      %v428 = vsub.s32 0, %v427
      %v429 = vrot.slane %v424, %v428
      %431 = vmatprep.subr.mxu0 0.0
      %432 = vmatpush1.msra.mxu0 %v423
      %433 = vmatprep.subr.mxu0 0.0
      %434 = vmatpush1.msra.mxu0 %v422
      %435 = vmatprep.subr.mxu0 0.0
      %436 = vmatpush1.msra.mxu0 %v421
      %437 = vmatprep.subr.mxu0 0.0
      %438 = vmatpush1.msra.mxu0 %v420
      %439 = vmatprep.subr.mxu0 0.0
      %440 = vmatpush1.msra.mxu0 %v419
      %441 = vmatprep.subr.mxu0 0.0
      %442 = vmatpush1.msra.mxu0 %v418
      %443 = vmatprep.subr.mxu0 0.0
      %444 = vmatpush1.msra.mxu0 %v417
      %445 = vmatprep.subr.mxu0 0.0
      %446 = vmatpush1.msra.mxu0 %v416
      %447 = vmatprep.subr.mxu0 0.0
      %448 = vmatpush1.msra.mxu0 %v415
      %449 = vmatprep.subr.mxu0 0.0
      %450 = vmatpush1.msra.mxu0 %v414
      %451 = vmatprep.subr.mxu0 0.0
      %452 = vmatpush1.msra.mxu0 %v413
      %453 = vmatprep.subr.mxu0 0.0
      %454 = vmatpush1.msra.mxu0 %v412
      %455 = vmatprep.subr.mxu0 0.0
      %456 = vmatpush1.msra.mxu0 %v411
      %457 = vmatprep.subr.mxu0 0.0
      %458 = vmatpush1.msra.mxu0 %v410
      %459 = vmatprep.subr.mxu0 0.0
      %460 = vmatpush1.msra.mxu0 %v409
      %461 = vmatprep.subr.mxu0 0.0
      %462 = vmatpush1.msra.mxu0 %v408
      %463 = vmatprep.subr.mxu0 0.0
      %464 = vmatpush2.msra.mxu0 0.0
      %465 = vmatprep.subr.mxu0 0.0
      %466 = vmatpush2.msra.mxu0 0.0
      %467 = vmatprep.subr.mxu0 0.0
      %468 = vmatpush2.msra.mxu0 0.0
      %469 = vmatprep.subr.mxu0 0.0
      %470 = vmatpush2.msra.mxu0 0.0
      %471 = vmatprep.subr.mxu0 0.0
      %472 = vmatpush2.msra.mxu0 0.0
      %473 = vmatprep.subr.mxu0 0.0
      %474 = vmatpush2.msra.mxu0 0.0
      %475 = vmatprep.subr.mxu0 0.0
      %476 = vmatpush2.msra.mxu0 0.0
      %477 = vmatprep.subr.mxu0 0.0
      %478 = vmatpush2.msra.mxu0 0.0
      %479 = vmatprep.subr.mxu0 0.0
      %480 = vmatpush2.msra.mxu0 0.0
      %481 = vmatprep.subr.mxu0 0.0
      %482 = vmatpush2.msra.mxu0 0.0
      %483 = vmatprep.subr.mxu0 0.0
      %484 = vmatpush2.msra.mxu0 0.0
      %485 = vmatprep.subr.mxu0 0.0
      %486 = vmatpush2.msra.mxu0 0.0
      %487 = vmatprep.subr.mxu0 0.0
      %488 = vmatpush2.msra.mxu0 0.0
      %489 = vmatprep.subr.mxu0 0.0
      %490 = vmatpush2.msra.mxu0 0.0
      %491 = vmatprep.subr.mxu0 0.0
      %492 = vmatpush2.msra.mxu0 0.0
      %493 = vmatprep.subr.mxu0 0.0
      %494 = vmatpush2.msra.mxu0 0.0
      %495 = vmatprep.mubr.f32.mxu0 0.0
      %496 = vmatmul.mubr.f32.gmra.mxu0 %v407
      %v497 = vpop.f32.mrf.mxu0
      %v498 = vadd.f32 %v429, %v497
      %v499 = vpop.f32.mrf.mxu0
      %500 = vdwg.mxu0
      %v501 = vadd.f32 %v498, %v277
      %v502 = vadd.f32 %v501, %v407
      %v503 = vxor.u32 %v502, 2147483648
      %v504 = vmul.f32 %v503, 1.442695
      %v505 = vpow.pop %v504
      %v506 = vadd.f32 %v505, 1.0
      %v507 = vrcp.pop %v506
      %v508 = vmul.f32 1.0, %v507
      %v509 = vmul.f32 %v502, %v508
      %v510 = vld [vmem:[%s11] sm:$0x1]
      %v511 = vld [vmem:[%s12] sm:$0x1]
      %512 = vadd.xlane.f32.xlu0 %v509
      %v513 = vpop.xlane.xlu0 %512
      %v514 = vmul.f32 %v509, %v509
      %515 = vadd.xlane.f32.xlu0 %v514
      %v516 = vpop.xlane.xlu0 %515
      %v517 = vmul.f32 %v513, 0.03125
      %v518 = vmul.f32 %v516, 0.03125
      %v519 = vmul.f32 %v517, %v517
      %v520 = vsub.f32 %v518, %v519
      %v521 = vadd.f32 %v520, 0.1
      %v522 = vrsqrt.pop %v521
      %v523 = vsub.f32 %v509, %v517
      %v524 = vmul.f32 %v523, %v522
      %v526 = vlaneseq
      %v527 = vshrl.u32 %v526, 7
      %v528 = vsub.s32 0, %v527
      %v529 = vrot.slane %v510, %v528
      %v531 = vmul.f32 %v524, %v529
      %v533 = vlaneseq
      %v534 = vshrl.u32 %v533, 7
      %v535 = vsub.s32 0, %v534
      %v536 = vrot.slane %v511, %v535
      %v538 = vadd.f32 %v531, %v536
      %v539 = vld [vmem:[#allocation12] sm:$0xff]
      %v540 = vld [vmem:[#allocation12 + $0x8] sm:$0xff]
      %v541 = vld [vmem:[#allocation12 + $0x10] sm:$0xff]
      %v542 = vld [vmem:[#allocation12 + $0x18] sm:$0xff]
      %v543 = vld [vmem:[#allocation12 + $0x20] sm:$0xff]
      %v544 = vld [vmem:[#allocation12 + $0x28] sm:$0xff]
      %v545 = vld [vmem:[#allocation12 + $0x30] sm:$0xff]
      %v546 = vld [vmem:[#allocation12 + $0x38] sm:$0xff]
      %v547 = vld [vmem:[#allocation12 + $0x40] sm:$0xff]
      %v548 = vld [vmem:[#allocation12 + $0x48] sm:$0xff]
      %v549 = vld [vmem:[#allocation12 + $0x50] sm:$0xff]
      %v550 = vld [vmem:[#allocation12 + $0x58] sm:$0xff]
      %v551 = vld [vmem:[#allocation12 + $0x60] sm:$0xff]
      %v552 = vld [vmem:[#allocation12 + $0x68] sm:$0xff]
      %v553 = vld [vmem:[#allocation12 + $0x70] sm:$0xff]
      %v554 = vld [vmem:[#allocation12 + $0x78] sm:$0xff]
      %v555 = vld [vmem:[%s14] sm:$0x1]
      %v557 = vlaneseq
      %v558 = vshrl.u32 %v557, 7
      %v559 = vsub.s32 0, %v558
      %v560 = vrot.slane %v555, %v559
      %562 = vmatprep.subr.mxu0 0.0
      %563 = vmatpush1.msra.mxu0 %v554
      %564 = vmatprep.subr.mxu0 0.0
      %565 = vmatpush1.msra.mxu0 %v553
      %566 = vmatprep.subr.mxu0 0.0
      %567 = vmatpush1.msra.mxu0 %v552
      %568 = vmatprep.subr.mxu0 0.0
      %569 = vmatpush1.msra.mxu0 %v551
      %570 = vmatprep.subr.mxu0 0.0
      %571 = vmatpush1.msra.mxu0 %v550
      %572 = vmatprep.subr.mxu0 0.0
      %573 = vmatpush1.msra.mxu0 %v549
      %574 = vmatprep.subr.mxu0 0.0
      %575 = vmatpush1.msra.mxu0 %v548
      %576 = vmatprep.subr.mxu0 0.0
      %577 = vmatpush1.msra.mxu0 %v547
      %578 = vmatprep.subr.mxu0 0.0
      %579 = vmatpush1.msra.mxu0 %v546
      %580 = vmatprep.subr.mxu0 0.0
      %581 = vmatpush1.msra.mxu0 %v545
      %582 = vmatprep.subr.mxu0 0.0
      %583 = vmatpush1.msra.mxu0 %v544
      %584 = vmatprep.subr.mxu0 0.0
      %585 = vmatpush1.msra.mxu0 %v543
      %586 = vmatprep.subr.mxu0 0.0
      %587 = vmatpush1.msra.mxu0 %v542
      %588 = vmatprep.subr.mxu0 0.0
      %589 = vmatpush1.msra.mxu0 %v541
      %590 = vmatprep.subr.mxu0 0.0
      %591 = vmatpush1.msra.mxu0 %v540
      %592 = vmatprep.subr.mxu0 0.0
      %593 = vmatpush1.msra.mxu0 %v539
      %594 = vmatprep.subr.mxu0 0.0
      %595 = vmatpush2.msra.mxu0 0.0
      %596 = vmatprep.subr.mxu0 0.0
      %597 = vmatpush2.msra.mxu0 0.0
      %598 = vmatprep.subr.mxu0 0.0
      %599 = vmatpush2.msra.mxu0 0.0
      %600 = vmatprep.subr.mxu0 0.0
      %601 = vmatpush2.msra.mxu0 0.0
      %602 = vmatprep.subr.mxu0 0.0
      %603 = vmatpush2.msra.mxu0 0.0
      %604 = vmatprep.subr.mxu0 0.0
      %605 = vmatpush2.msra.mxu0 0.0
      %606 = vmatprep.subr.mxu0 0.0
      %607 = vmatpush2.msra.mxu0 0.0
      %608 = vmatprep.subr.mxu0 0.0
      %609 = vmatpush2.msra.mxu0 0.0
      %610 = vmatprep.subr.mxu0 0.0
      %611 = vmatpush2.msra.mxu0 0.0
      %612 = vmatprep.subr.mxu0 0.0
      %613 = vmatpush2.msra.mxu0 0.0
      %614 = vmatprep.subr.mxu0 0.0
      %615 = vmatpush2.msra.mxu0 0.0
      %616 = vmatprep.subr.mxu0 0.0
      %617 = vmatpush2.msra.mxu0 0.0
      %618 = vmatprep.subr.mxu0 0.0
      %619 = vmatpush2.msra.mxu0 0.0
      %620 = vmatprep.subr.mxu0 0.0
      %621 = vmatpush2.msra.mxu0 0.0
      %622 = vmatprep.subr.mxu0 0.0
      %623 = vmatpush2.msra.mxu0 0.0
      %624 = vmatprep.subr.mxu0 0.0
      %625 = vmatpush2.msra.mxu0 0.0
      %626 = vmatprep.mubr.f32.mxu0 0.0
      %627 = vmatmul.mubr.f32.gmra.mxu0 %v538
      %v628 = vpop.f32.mrf.mxu0
      %v629 = vadd.f32 %v560, %v628
      %v630 = vpop.f32.mrf.mxu0
      %631 = vdwg.mxu0
      %632 = vst [vmem:[#allocation13] sm:$0xff] %v629
    $region89: #{tpu_custom_call.1} parent=1 // pred_fallthru
      _
    // Predicated region
    $region90: #{tpu_custom_call.1} parent=1 // pred_check
      _
    $region91: #{tpu_custom_call.1} parent=1 // pred_check_branch
      %634 = sbr.rel (0) target = $region93
    $region92: #{tpu_custom_call.1} parent=1 // pred_region
      %s636 = ssub.s32 128, 128
      %637 = vsyncadd [#allocation6], %s636
      %s639 = sshll.u32 [#allocation13], 4
      %s640 = int_to_ptr.vmem [resolvable:$true] %s639
      %642 = dma.vmem_to_hbm [thread:$0]  %s640, 128, %s15, [#allocation6]
    $region93: #{tpu_custom_call.1} parent=1 // pred_fallthru
      _
    // Predicated region
    $region94: #{tpu_custom_call.1} parent=1 // pred_check
      _
    $region95: #{tpu_custom_call.1} parent=1 // pred_check_branch
      %644 = sbr.rel (0) target = $region97
    $region96: #{tpu_custom_call.1} parent=1 // pred_region
      %645 = dma.done [#allocation6], 128
    $region97: #{tpu_custom_call.1} parent=1 // pred_fallthru
      _
    %646 = vsyncpa [#allocation5], 1
    %647 = vsyncpa [#allocation8], 1
    %648 = vsyncpa [#allocation11], 1
    %649 = vsyncpa [#allocation6], 1

</llo_original>
